<compile_context>
chip_gen: v7x
topology: tpu7x:2x2x1
jax: 0.10.0
libtpu: 0.0.40
codegen_flags: <defaults>
</compile_context>

<pallas_src>
import math

import jax
import jax.numpy as jnp
from jax.experimental import pallas as pl
from jax.experimental.pallas import tpu as pltpu


def _round_up(x, m):
    return (x + m - 1) // m * m


# ----------------------------------------------------------------------------
# Pallas kernel: fused 4-layer MLP (the Critic forward pass) for one batch tile
# ----------------------------------------------------------------------------
def critic_kernel(state_ref, act_ref,
                  w1s_ref, w1a_ref, b1_ref,
                  w2_ref, b2_ref,
                  w3_ref, b3_ref,
                  w4_ref, b4_ref,
                  o_ref):
    # fc1 as a split-K matmul (bit-identical to matmul on concat([state, act]),
    # without the HBM concat round trip). Inputs already arrive as bf16.
    s = state_ref[...]
    a = act_ref[...]
    h1 = (jnp.dot(s, w1s_ref[...], preferred_element_type=jnp.float32)
          + jnp.dot(a, w1a_ref[...], preferred_element_type=jnp.float32)
          + b1_ref[...])
    h1 = jnp.maximum(h1, 0.0)                      # f32 elementwise path

    # fc2 + ReLU  (cast to bf16 only at the MXU boundary)
    h2 = jnp.dot(h1.astype(jnp.bfloat16), w2_ref[...],
                 preferred_element_type=jnp.float32) + b2_ref[...]
    h2 = jnp.maximum(h2, 0.0)

    # fc3 + ReLU
    h3 = jnp.dot(h2.astype(jnp.bfloat16), w3_ref[...],
                 preferred_element_type=jnp.float32) + b3_ref[...]
    h3 = jnp.maximum(h3, 0.0)

    # fc4: N=1 -> VPU multiply + XLU reduce instead of a lane-sparse matmul.
    # w4_ref is the transposed fc4 weight, shape (1, hidden//2), f32.
    out = jnp.sum(h3 * w4_ref[...], axis=-1, keepdims=True) + b4_ref[0, 0]
    o_ref[...] = out.astype(o_ref.dtype)


# ----------------------------------------------------------------------------
# One-time parameter preparation (cache this pytree; do NOT redo per forward)
# ----------------------------------------------------------------------------
def prepare_critic_params(params, state_dim):
    """Split fc1 along K, pre-cast MXU weights to bf16, transpose fc4 row."""
    (w1, b1), (w2, b2), (w3, b3), (w4, b4) = params
    return {
        "w1s": w1[:state_dim].astype(jnp.bfloat16),
        "w1a": w1[state_dim:].astype(jnp.bfloat16),
        "b1": b1.astype(jnp.float32),
        "w2": w2.astype(jnp.bfloat16),
        "b2": b2.astype(jnp.float32),
        "w3": w3.astype(jnp.bfloat16),
        "b3": b3.astype(jnp.float32),
        "w4row": w4.T.astype(jnp.float32),          # (1, hidden//2), VPU path
        "b4": b4.reshape(1, 1).astype(jnp.float32),  # scalar -> SMEM
    }


# ----------------------------------------------------------------------------
# Wrapper
# ----------------------------------------------------------------------------
def critic_forward(state, actions, params, *, batch_tile=512):
    """Pallas-backed Critic.forward(state, actions).

    state:   [B, state_dim]        float
    actions: [B, total_action_dim] float (or a list/tuple of per-agent arrays)
    params:  prepared dict from prepare_critic_params(), or the raw
             [(w,b)x4] list (prepared on the fly -- prefer caching).
    returns: [B, 1] float32
    """
    if isinstance(actions, (list, tuple)):
        actions = jnp.concatenate(actions, axis=1)

    if not isinstance(params, dict):
        params = prepare_critic_params(params, state.shape[1])
    p = params

    B = state.shape[0]

    # Batch tiling: large tiles (step overhead ~0.35us dominates small tiles),
    # but guarantee >= 2 grid steps for big batches so v7x's two TensorCores
    # both get work on the "parallel" axis. Align to 16 rows (bf16 sublanes).
    tb = min(batch_tile, _round_up(B, 16))
    if B >= 32 and _round_up(B, tb) // tb < 2:
        tb = _round_up(-(-B // 2), 16)             # ceil(B/2), 16-aligned
    b_pad = _round_up(B, tb)

    # Stream activations as bf16 (halves input DMA bytes vs f32).
    state = state.astype(jnp.bfloat16)
    actions = actions.astype(jnp.bfloat16)
    if b_pad != B:
        pad = ((0, b_pad - B), (0, 0))
        state = jnp.pad(state, pad)
        actions = jnp.pad(actions, pad)

    grid = (b_pad // tb,)

    def row_spec(feat):
        return pl.BlockSpec((tb, feat), lambda i: (i, 0))

    def resident(arr):
        # Whole array, constant index map -> DMA'd once, stays in VMEM.
        return pl.BlockSpec(arr.shape, lambda i: (0, 0))

    out = pl.pallas_call(
        critic_kernel,
        out_shape=jax.ShapeDtypeStruct((b_pad, 1), jnp.float32),
        grid=grid,
        in_specs=[row_spec(state.shape[1]), row_spec(actions.shape[1]),
                  resident(p["w1s"]), resident(p["w1a"]), resident(p["b1"]),
                  resident(p["w2"]), resident(p["b2"]),
                  resident(p["w3"]), resident(p["b3"]),
                  resident(p["w4row"]),
                  pl.BlockSpec(memory_space=pltpu.MemorySpace.SMEM)],
        out_specs=pl.BlockSpec((tb, 1), lambda i: (i, 0)),
        compiler_params=pltpu.CompilerParams(
            dimension_semantics=("parallel",)),
    )(state, actions,
      p["w1s"], p["w1a"], p["b1"],
      p["w2"], p["b2"],
      p["w3"], p["b3"],
      p["w4row"], p["b4"])

    return out[:B]


# ----------------------------------------------------------------------------
# Deterministic parameter initialization (mirrors Critic.reset_parameters)
# ----------------------------------------------------------------------------
def init_critic_params(key, state_dim, total_action_dim, hidden_dim=512):
    in_dim = state_dim + total_action_dim
    dims = [(in_dim, hidden_dim),
            (hidden_dim, hidden_dim),
            (hidden_dim, hidden_dim // 2),
            (hidden_dim // 2, 1)]

    params = []
    for i, (fan_in, fan_out) in enumerate(dims):
        key, kw, kb = jax.random.split(key, 3)
        if i < 3:
            # kaiming_normal_(mode='fan_in', nonlinearity='relu'): std = sqrt(2/fan_in)
            std = math.sqrt(2.0 / fan_in)
            w = std * jax.random.normal(kw, (fan_in, fan_out), dtype=jnp.float32)
        else:
            # fc4: uniform_(-0.003, 0.003)
            w = jax.random.uniform(kw, (fan_in, fan_out), dtype=jnp.float32,
                                   minval=-0.003, maxval=0.003)
        # biases keep PyTorch Linear default: U(-1/sqrt(fan_in), 1/sqrt(fan_in))
        bound = 1.0 / math.sqrt(fan_in)
        b = jax.random.uniform(kb, (1, fan_out), dtype=jnp.float32,
                               minval=-bound, maxval=bound)
        params.append((w, b))
    return params


# ----------------------------------------------------------------------------
# References for correctness checks
# ----------------------------------------------------------------------------
def critic_ref_f32(state, actions, params):
    x = jnp.concatenate([state, actions], axis=1)
    (w1, b1), (w2, b2), (w3, b3), (w4, b4) = params
    x = jnp.maximum(x @ w1 + b1, 0.0)
    x = jnp.maximum(x @ w2 + b2, 0.0)
    x = jnp.maximum(x @ w3 + b3, 0.0)
    return x @ w4 + b4


def critic_ref_bf16(state, actions, params):
    # Mirrors the kernel's casting scheme (bf16 MXU inputs, f32 accum/elementwise).
    bf = lambda t: t.astype(jnp.bfloat16)
    x = jnp.concatenate([state, actions], axis=1)
    (w1, b1), (w2, b2), (w3, b3), (w4, b4) = params
    h = jnp.maximum(jnp.dot(bf(x), bf(w1), preferred_element_type=jnp.float32) + b1, 0.0)
    h = jnp.maximum(jnp.dot(bf(h), bf(w2), preferred_element_type=jnp.float32) + b2, 0.0)
    h = jnp.maximum(jnp.dot(bf(h), bf(w3), preferred_element_type=jnp.float32) + b3, 0.0)
    return jnp.sum(h * w4.T, axis=-1, keepdims=True) + b4


if __name__ == "__main__":
    # Small, module-consistent shapes.
    batch = 8
    state_dim = 16
    total_action_dim = 16
    hidden_dim = 32

    key = jax.random.PRNGKey(0)
    kp, ks, ka = jax.random.split(key, 3)

    params = init_critic_params(kp, state_dim, total_action_dim, hidden_dim)
    state = jax.random.normal(ks, (batch, state_dim), dtype=jnp.float32)
    actions = jax.random.normal(ka, (batch, total_action_dim), dtype=jnp.float32)

    # Prepare (split/cast) weights once; reuse across forward calls.
    prepared = prepare_critic_params(params, state_dim)

    out = critic_forward(state, actions, prepared)
    out = jax.block_until_ready(out)
    assert out.shape == (batch, 1)

    # Tight check vs. a reference using the same bf16 casting scheme.
    ref_bf16 = critic_ref_bf16(state, actions, params)
    assert jnp.allclose(out, ref_bf16, atol=1e-3, rtol=1e-2), \
        f"max err vs bf16 ref: {jnp.max(jnp.abs(out - ref_bf16))}"

    # Loose check vs. the full-f32 reference (bf16 rounding of inputs/weights).
    ref_f32 = critic_ref_f32(state, actions, params)
    assert jnp.allclose(out, ref_f32, atol=2e-2, rtol=2e-2), \
        f"max err vs f32 ref: {jnp.max(jnp.abs(out - ref_f32))}"

    print("KERNEL_OK")
</pallas_src>

<mosaic_0001>
module attributes {stable_mosaic.version = 11 : i64} {
  func.func @critic_kernel(%arg0: i32, %arg1: memref<16x16xbf16, #tpu.memory_space<vmem>>, %arg2: memref<16x16xbf16, #tpu.memory_space<vmem>>, %arg3: memref<16x32xbf16, #tpu.memory_space<vmem>>, %arg4: memref<16x32xbf16, #tpu.memory_space<vmem>>, %arg5: memref<1x32xf32, #tpu.memory_space<vmem>>, %arg6: memref<32x32xbf16, #tpu.memory_space<vmem>>, %arg7: memref<1x32xf32, #tpu.memory_space<vmem>>, %arg8: memref<32x16xbf16, #tpu.memory_space<vmem>>, %arg9: memref<1x16xf32, #tpu.memory_space<vmem>>, %arg10: memref<1x16xf32, #tpu.memory_space<vmem>>, %arg11: memref<1x1xf32, #tpu.memory_space<smem>>, %arg12: memref<16x1xf32, #tpu.memory_space<vmem>>) attributes {dimension_semantics = [#tpu.dimension_semantics<parallel>], iteration_bounds = array<i64: 1>, scalar_prefetch = 0 : i64, scratch_operands = 0 : i64, tpu.core_type = #tpu.core_type<tc>, window_params = [{transform_indices = @transform_0, window_bounds = array<i64: 16, 16>}, {transform_indices = @transform_1, window_bounds = array<i64: 16, 16>}, {pipeline_mode = #tpu.pipeline_mode<synchronous>, transform_indices = @transform_2, window_bounds = array<i64: 16, 32>}, {pipeline_mode = #tpu.pipeline_mode<synchronous>, transform_indices = @transform_3, window_bounds = array<i64: 16, 32>}, {pipeline_mode = #tpu.pipeline_mode<synchronous>, transform_indices = @transform_4, window_bounds = array<i64: 1, 32>}, {pipeline_mode = #tpu.pipeline_mode<synchronous>, transform_indices = @transform_5, window_bounds = array<i64: 32, 32>}, {pipeline_mode = #tpu.pipeline_mode<synchronous>, transform_indices = @transform_6, window_bounds = array<i64: 1, 32>}, {pipeline_mode = #tpu.pipeline_mode<synchronous>, transform_indices = @transform_7, window_bounds = array<i64: 32, 16>}, {pipeline_mode = #tpu.pipeline_mode<synchronous>, transform_indices = @transform_8, window_bounds = array<i64: 1, 16>}, {pipeline_mode = #tpu.pipeline_mode<synchronous>, transform_indices = @transform_9, window_bounds = array<i64: 1, 16>}, {transform_indices = @transform_10, window_bounds = array<i64: 1, 1>}, {transform_indices = @transform_11, window_bounds = array<i64: 16, 1>}]} {
    %c0 = arith.constant 0 : index
    %c0_0 = arith.constant 0 : index
    %0 = vector.load %arg1[%c0, %c0_0] : memref<16x16xbf16, #tpu.memory_space<vmem>>, vector<16x16xbf16>
    %c0_1 = arith.constant 0 : index
    %c0_2 = arith.constant 0 : index
    %1 = vector.load %arg2[%c0_1, %c0_2] : memref<16x16xbf16, #tpu.memory_space<vmem>>, vector<16x16xbf16>
    %c0_3 = arith.constant 0 : index
    %c0_4 = arith.constant 0 : index
    %2 = vector.load %arg3[%c0_3, %c0_4] : memref<16x32xbf16, #tpu.memory_space<vmem>>, vector<16x32xbf16>
    %cst = arith.constant dense<0.000000e+00> : vector<16x32xf32>
    %3 = tpu.matmul %0, %2, %cst {dimension_numbers = #tpu.dot_dimension_numbers<[1], [0], [0], [1], [0, 0, 1, 1], [], []>} : vector<16x16xbf16>, vector<16x32xbf16>, vector<16x32xf32> -> vector<16x32xf32>
    %c0_5 = arith.constant 0 : index
    %c0_6 = arith.constant 0 : index
    %4 = vector.load %arg4[%c0_5, %c0_6] : memref<16x32xbf16, #tpu.memory_space<vmem>>, vector<16x32xbf16>
    %cst_7 = arith.constant dense<0.000000e+00> : vector<16x32xf32>
    %5 = tpu.matmul %1, %4, %cst_7 {dimension_numbers = #tpu.dot_dimension_numbers<[1], [0], [0], [1], [0, 0, 1, 1], [], []>} : vector<16x16xbf16>, vector<16x32xbf16>, vector<16x32xf32> -> vector<16x32xf32>
    %6 = arith.addf %3, %5 : vector<16x32xf32>
    %c0_8 = arith.constant 0 : index
    %c0_9 = arith.constant 0 : index
    %7 = vector.load %arg5[%c0_8, %c0_9] : memref<1x32xf32, #tpu.memory_space<vmem>>, vector<1x32xf32>
    %8 = vector.broadcast %7 : vector<1x32xf32> to vector<16x32xf32>
    %9 = arith.addf %6, %8 : vector<16x32xf32>
    %cst_10 = arith.constant 0.000000e+00 : f32
    %10 = vector.broadcast %cst_10 : f32 to vector<16x32xf32>
    %11 = arith.maximumf %9, %10 : vector<16x32xf32>
    %12 = arith.truncf %11 : vector<16x32xf32> to vector<16x32xbf16>
    %c0_11 = arith.constant 0 : index
    %c0_12 = arith.constant 0 : index
    %13 = vector.load %arg6[%c0_11, %c0_12] : memref<32x32xbf16, #tpu.memory_space<vmem>>, vector<32x32xbf16>
    %cst_13 = arith.constant dense<0.000000e+00> : vector<16x32xf32>
    %14 = tpu.matmul %12, %13, %cst_13 {dimension_numbers = #tpu.dot_dimension_numbers<[1], [0], [0], [1], [0, 0, 1, 1], [], []>} : vector<16x32xbf16>, vector<32x32xbf16>, vector<16x32xf32> -> vector<16x32xf32>
    %c0_14 = arith.constant 0 : index
    %c0_15 = arith.constant 0 : index
    %15 = vector.load %arg7[%c0_14, %c0_15] : memref<1x32xf32, #tpu.memory_space<vmem>>, vector<1x32xf32>
    %16 = vector.broadcast %15 : vector<1x32xf32> to vector<16x32xf32>
    %17 = arith.addf %14, %16 : vector<16x32xf32>
    %cst_16 = arith.constant 0.000000e+00 : f32
    %18 = vector.broadcast %cst_16 : f32 to vector<16x32xf32>
    %19 = arith.maximumf %17, %18 : vector<16x32xf32>
    %20 = arith.truncf %19 : vector<16x32xf32> to vector<16x32xbf16>
    %c0_17 = arith.constant 0 : index
    %c0_18 = arith.constant 0 : index
    %21 = vector.load %arg8[%c0_17, %c0_18] : memref<32x16xbf16, #tpu.memory_space<vmem>>, vector<32x16xbf16>
    %cst_19 = arith.constant dense<0.000000e+00> : vector<16x16xf32>
    %22 = tpu.matmul %20, %21, %cst_19 {dimension_numbers = #tpu.dot_dimension_numbers<[1], [0], [0], [1], [0, 0, 1, 1], [], []>} : vector<16x32xbf16>, vector<32x16xbf16>, vector<16x16xf32> -> vector<16x16xf32>
    %c0_20 = arith.constant 0 : index
    %c0_21 = arith.constant 0 : index
    %23 = vector.load %arg9[%c0_20, %c0_21] : memref<1x16xf32, #tpu.memory_space<vmem>>, vector<1x16xf32>
    %24 = vector.broadcast %23 : vector<1x16xf32> to vector<16x16xf32>
    %25 = arith.addf %22, %24 : vector<16x16xf32>
    %cst_22 = arith.constant 0.000000e+00 : f32
    %26 = vector.broadcast %cst_22 : f32 to vector<16x16xf32>
    %27 = arith.maximumf %25, %26 : vector<16x16xf32>
    %c0_23 = arith.constant 0 : index
    %c0_24 = arith.constant 0 : index
    %28 = vector.load %arg10[%c0_23, %c0_24] : memref<1x16xf32, #tpu.memory_space<vmem>>, vector<1x16xf32>
    %29 = vector.broadcast %28 : vector<1x16xf32> to vector<16x16xf32>
    %30 = arith.mulf %27, %29 : vector<16x16xf32>
    %cst_25 = arith.constant dense<0.000000e+00> : vector<16xf32>
    %31 = vector.multi_reduction <add>, %30, %cst_25 [1] : vector<16x16xf32> to vector<16xf32>
    %32 = vector.shape_cast %31 : vector<16xf32> to vector<16x1xf32>
    %c0_26 = arith.constant 0 : index
    %c0_27 = arith.constant 0 : index
    %33 = memref.load %arg11[%c0_26, %c0_27] : memref<1x1xf32, #tpu.memory_space<smem>>
    %34 = vector.broadcast %33 : f32 to vector<16x1xf32>
    %35 = arith.addf %32, %34 : vector<16x1xf32>
    %c0_28 = arith.constant 0 : index
    %c0_29 = arith.constant 0 : index
    %36 = vector.load %arg12[%c0_28, %c0_29] : memref<16x1xf32, #tpu.memory_space<vmem>>, vector<16x1xf32>
    tpu.vector_store %arg12[%c0_28, %c0_29], %35 {strides = array<i32>} : memref<16x1xf32, #tpu.memory_space<vmem>>, vector<16x1xf32>,
    return
  }
  func.func @transform_0(%arg0: i32) -> (i32, i32) {
    %c0_i32 = arith.constant 0 : i32
    %c0_i32_0 = arith.constant 0 : i32
    return %arg0, %c0_i32 : i32, i32
  }
  func.func @transform_1(%arg0: i32) -> (i32, i32) {
    %c0_i32 = arith.constant 0 : i32
    %c0_i32_0 = arith.constant 0 : i32
    return %arg0, %c0_i32 : i32, i32
  }
  func.func @transform_2(%arg0: i32) -> (i32, i32) {
    %c0_i32 = arith.constant 0 : i32
    %c0_i32_0 = arith.constant 0 : i32
    %c0_i32_1 = arith.constant 0 : i32
    return %c0_i32, %c0_i32_0 : i32, i32
  }
  func.func @transform_3(%arg0: i32) -> (i32, i32) {
    %c0_i32 = arith.constant 0 : i32
    %c0_i32_0 = arith.constant 0 : i32
    %c0_i32_1 = arith.constant 0 : i32
    return %c0_i32, %c0_i32_0 : i32, i32
  }
  func.func @transform_4(%arg0: i32) -> (i32, i32) {
    %c0_i32 = arith.constant 0 : i32
    %c0_i32_0 = arith.constant 0 : i32
    %c0_i32_1 = arith.constant 0 : i32
    return %c0_i32, %c0_i32_0 : i32, i32
  }
  func.func @transform_5(%arg0: i32) -> (i32, i32) {
    %c0_i32 = arith.constant 0 : i32
    %c0_i32_0 = arith.constant 0 : i32
    %c0_i32_1 = arith.constant 0 : i32
    return %c0_i32, %c0_i32_0 : i32, i32
  }
  func.func @transform_6(%arg0: i32) -> (i32, i32) {
    %c0_i32 = arith.constant 0 : i32
    %c0_i32_0 = arith.constant 0 : i32
    %c0_i32_1 = arith.constant 0 : i32
    return %c0_i32, %c0_i32_0 : i32, i32
  }
  func.func @transform_7(%arg0: i32) -> (i32, i32) {
    %c0_i32 = arith.constant 0 : i32
    %c0_i32_0 = arith.constant 0 : i32
    %c0_i32_1 = arith.constant 0 : i32
    return %c0_i32, %c0_i32_0 : i32, i32
  }
  func.func @transform_8(%arg0: i32) -> (i32, i32) {
    %c0_i32 = arith.constant 0 : i32
    %c0_i32_0 = arith.constant 0 : i32
    %c0_i32_1 = arith.constant 0 : i32
    return %c0_i32, %c0_i32_0 : i32, i32
  }
  func.func @transform_9(%arg0: i32) -> (i32, i32) {
    %c0_i32 = arith.constant 0 : i32
    %c0_i32_0 = arith.constant 0 : i32
    %c0_i32_1 = arith.constant 0 : i32
    return %c0_i32, %c0_i32_0 : i32, i32
  }
  func.func @transform_10(%arg0: i32) -> (i32, i32) {
    %c0_i32 = arith.constant 0 : i32
    %c0_i32_0 = arith.constant 0 : i32
    %c0_i32_1 = arith.constant 0 : i32
    return %c0_i32, %c0_i32_0 : i32, i32
  }
  func.func @transform_11(%arg0: i32) -> (i32, i32) {
    %c0_i32 = arith.constant 0 : i32
    %c0_i32_0 = arith.constant 0 : i32
    return %arg0, %c0_i32 : i32, i32
  }
}

</mosaic_0001>

<llo_original>
// kernel: tpu_custom_call.1
$region0: #{tpu_custom_call.1}
  #allocation0 [shape = 'u32[]', space=smem, size = 0x4, offset = 0x4, fixed_abs, tag = 'smem constant byte address 0x4 - core index']
  #allocation1 [shape = 'u32[144,128]{1,0:T(1,128)}', space=vmem, size = 0x12000, scoped, tag = 'internal scratch']
  #allocation2 [shape = 'f32[1,1]{1,0:T(1,128)S(6)}', space=smem, size = 0x200, scoped, tag = 'scoped memory for tpu_custom_call.1']
  %s0 = inlined_call_operand.vmem [shape: bf16[16,16], index: 0, kind: input, shape index: {}]
  %s1 = inlined_call_operand.hbm [shape: bf16[16,16], index: 1, kind: input, shape index: {}]
  %s2 = inlined_call_operand.hbm [shape: bf16[16,32], index: 2, kind: input, shape index: {}]
  %s3 = inlined_call_operand.hbm [shape: bf16[16,32], index: 3, kind: input, shape index: {}]
  %s4 = inlined_call_operand.vmem [shape: f32[1,32], index: 4, kind: input, shape index: {}]
  %s5 = inlined_call_operand.vmem [shape: bf16[32,32], index: 5, kind: input, shape index: {}]
  %s6 = inlined_call_operand.vmem [shape: f32[1,32], index: 6, kind: input, shape index: {}]
  %s7 = inlined_call_operand.vmem [shape: bf16[32,16], index: 7, kind: input, shape index: {}]
  %s8 = inlined_call_operand.vmem [shape: f32[1,16], index: 8, kind: input, shape index: {}]
  %s9 = inlined_call_operand.vmem [shape: f32[1,16], index: 9, kind: input, shape index: {}]
  %s10 = inlined_call_operand.<no memory space> [shape: f32[1,1], index: 10, kind: input, shape index: {}]
  %s11 = inlined_call_operand.vmem [shape: f32[16,1], index: 11, kind: output, shape index: {}]
  %s12 = sld [smem:[#allocation0]]
  $region66: #{tpu_custom_call.1} parent=0
    _
  %s14 = ssub.s32 1, %s12
  %s15 = scalar_select 0, %s14, %s12
  %16 = sst [smem:[#allocation2]] %s10
  $region1: #{tpu_custom_call.1} parent=0
    #allocation3 [shape = 'u8[4096]{0}', space=vmem, size = 0x1000, scoped, tag = 'input window, operand 1, single buffered']
    #allocation4 [shape = 's32[1]{0}', space=sflag, size = 0x4, scoped, tag = 'scoped memory for tpu_custom_call.1']
    #allocation5 [shape = 'u8[4096]{0}', space=vmem, size = 0x1000, scoped, tag = 'input window, operand 2, single buffered']
    #allocation6 [shape = 's32[1]{0}', space=sflag, size = 0x4, scoped, tag = 'scoped memory for tpu_custom_call.1']
    #allocation7 [shape = 'u8[4096]{0}', space=vmem, size = 0x1000, scoped, tag = 'input window, operand 3, single buffered']
    %17 = vsyncpa [#allocation4], 0
    %18 = vsyncpa [#allocation6], 0
    // Predicated region
    $region2: #{tpu_custom_call.1} parent=1 // pred_check
      _
    $region3: #{tpu_custom_call.1} parent=1 // pred_check_branch
      %20 = sbr.rel (0) target = $region5
    $region4: #{tpu_custom_call.1} parent=1 // pred_region
      _
    $region5: #{tpu_custom_call.1} parent=1 // pred_fallthru
      _
    // Predicated region
    $region6: #{tpu_custom_call.1} parent=1 // pred_check
      _
    $region7: #{tpu_custom_call.1} parent=1 // pred_check_branch
      %22 = sbr.rel (0) target = $region9
    $region8: #{tpu_custom_call.1} parent=1 // pred_region
      %s24 = ssub.s32 128, 128
      %25 = vsyncadd [#allocation4], %s24
      %s26 = sshll.u32 [#allocation3], 4
      %s27 = int_to_ptr.vmem [resolvable:$true] %s26
      %32 = dma.hbm_to_vmem [thread:$0]  %s1, 128, %s27, [#allocation4], 64, 64, 4
    $region9: #{tpu_custom_call.1} parent=1 // pred_fallthru
      _
    // Predicated region
    $region10: #{tpu_custom_call.1} parent=1 // pred_check
      _
    $region11: #{tpu_custom_call.1} parent=1 // pred_check_branch
      %34 = sbr.rel (0) target = $region13
    $region12: #{tpu_custom_call.1} parent=1 // pred_region
      %s36 = ssub.s32 128, 128
      %37 = vsyncadd [#allocation6], %s36
      %s38 = sshll.u32 [#allocation5], 4
      %s39 = int_to_ptr.vmem [resolvable:$true] %s38
      %44 = dma.hbm_to_vmem [thread:$0]  %s2, 128, %s39, [#allocation6], 64, 64, 4
    $region13: #{tpu_custom_call.1} parent=1 // pred_fallthru
      _
    // Predicated region
    $region14: #{tpu_custom_call.1} parent=1 // pred_check
      _
    $region15: #{tpu_custom_call.1} parent=1 // pred_check_branch
      %46 = sbr.rel (0) target = $region17
    $region16: #{tpu_custom_call.1} parent=1 // pred_region
      %s48 = ssub.s32 128, 128
      %49 = vsyncadd [#allocation6], %s48
      %s50 = sshll.u32 [#allocation7], 4
      %s51 = int_to_ptr.vmem [resolvable:$true] %s50
      %56 = dma.hbm_to_vmem [thread:$0]  %s3, 128, %s51, [#allocation6], 64, 64, 4
    $region17: #{tpu_custom_call.1} parent=1 // pred_fallthru
      _
    // Predicated region
    $region18: #{tpu_custom_call.1} parent=1 // pred_check
      _
    $region19: #{tpu_custom_call.1} parent=1 // pred_check_branch
      %58 = sbr.rel (0) target = $region21
    $region20: #{tpu_custom_call.1} parent=1 // pred_region
      _
    $region21: #{tpu_custom_call.1} parent=1 // pred_fallthru
      _
    // Predicated region
    $region22: #{tpu_custom_call.1} parent=1 // pred_check
      _
    $region23: #{tpu_custom_call.1} parent=1 // pred_check_branch
      %60 = sbr.rel (0) target = $region25
    $region24: #{tpu_custom_call.1} parent=1 // pred_region
      _
    $region25: #{tpu_custom_call.1} parent=1 // pred_fallthru
      _
    // Predicated region
    $region26: #{tpu_custom_call.1} parent=1 // pred_check
      _
    $region27: #{tpu_custom_call.1} parent=1 // pred_check_branch
      %62 = sbr.rel (0) target = $region29
    $region28: #{tpu_custom_call.1} parent=1 // pred_region
      _
    $region29: #{tpu_custom_call.1} parent=1 // pred_fallthru
      _
    // Predicated region
    $region30: #{tpu_custom_call.1} parent=1 // pred_check
      _
    $region31: #{tpu_custom_call.1} parent=1 // pred_check_branch
      %64 = sbr.rel (0) target = $region33
    $region32: #{tpu_custom_call.1} parent=1 // pred_region
      _
    $region33: #{tpu_custom_call.1} parent=1 // pred_fallthru
      _
    // Predicated region
    $region34: #{tpu_custom_call.1} parent=1 // pred_check
      _
    $region35: #{tpu_custom_call.1} parent=1 // pred_check_branch
      %66 = sbr.rel (0) target = $region37
    $region36: #{tpu_custom_call.1} parent=1 // pred_region
      _
    $region37: #{tpu_custom_call.1} parent=1 // pred_fallthru
      _
    // Predicated region
    $region38: #{tpu_custom_call.1} parent=1 // pred_check
      _
    $region39: #{tpu_custom_call.1} parent=1 // pred_check_branch
      %68 = sbr.rel (0) target = $region41
    $region40: #{tpu_custom_call.1} parent=1 // pred_region
      _
    $region41: #{tpu_custom_call.1} parent=1 // pred_fallthru
      _
    // Predicated region
    $region42: #{tpu_custom_call.1} parent=1 // pred_check
      _
    $region43: #{tpu_custom_call.1} parent=1 // pred_check_branch
      %70 = sbr.rel (0) target = $region45
    $region44: #{tpu_custom_call.1} parent=1 // pred_region
      _
    $region45: #{tpu_custom_call.1} parent=1 // pred_fallthru
      _
    // Predicated region
    $region46: #{tpu_custom_call.1} parent=1 // pred_check
      _
    $region47: #{tpu_custom_call.1} parent=1 // pred_check_branch
      %72 = sbr.rel (0) target = $region49
    $region48: #{tpu_custom_call.1} parent=1 // pred_region
      %73 = dma.done [#allocation4], 128
    $region49: #{tpu_custom_call.1} parent=1 // pred_fallthru
      _
    // Predicated region
    $region50: #{tpu_custom_call.1} parent=1 // pred_check
      _
    $region51: #{tpu_custom_call.1} parent=1 // pred_check_branch
      %75 = sbr.rel (0) target = $region53
    $region52: #{tpu_custom_call.1} parent=1 // pred_region
      %76 = dma.done [#allocation6], 128
    $region53: #{tpu_custom_call.1} parent=1 // pred_fallthru
      _
    // Predicated region
    $region54: #{tpu_custom_call.1} parent=1 // pred_check
      _
    $region55: #{tpu_custom_call.1} parent=1 // pred_check_branch
      %78 = sbr.rel (0) target = $region57
    $region56: #{tpu_custom_call.1} parent=1 // pred_region
      %79 = dma.done [#allocation6], 128
    $region57: #{tpu_custom_call.1} parent=1 // pred_fallthru
      _
    %v81 = vld [vmem:[%s0] sm:$0xf]
    %v82 = vld [vmem:[%s0 + $0x4] sm:$0xf]
    %v83 = vld [vmem:[#allocation3] sm:$0xf]
    %v84 = vld [vmem:[#allocation3 + $0x4] sm:$0xf]
    %v85 = vld [vmem:[#allocation5] sm:$0xf]
    %v86 = vld [vmem:[#allocation5 + $0x4] sm:$0xf]
    %v87 = vld [vmem:[#allocation7] sm:$0xf]
    %v88 = vld [vmem:[#allocation7 + $0x4] sm:$0xf]
    %v91 = vunpack.c.l.b16 %v83
    %v92 = vunpack.c.l.b16 %v84
    %v93 = vpack.c.b16 %v92, %v91
    %v96 = vunpack.c.l.b16 %v87
    %v97 = vunpack.c.l.b16 %v88
    %v98 = vpack.c.b16 %v97, %v96
    %vm100 = vcmask 130048
    %v102 = vsel %vm100, %v93, 0
    %104 = vmatprep.subr.bf16.mxu0 0
    %105 = vmatpush1.bf16.msra.mxu0 %v98
    %106 = vmatprep.subr.bf16.mxu0 0
    %107 = vmatpush1.bf16.msra.mxu0 0
    %108 = vmatprep.subr.bf16.mxu0 0
    %109 = vmatpush1.bf16.msra.mxu0 0
    %110 = vmatprep.subr.bf16.mxu0 0
    %111 = vmatpush1.bf16.msra.mxu0 0
    %112 = vmatprep.subr.bf16.mxu0 0
    %113 = vmatpush1.bf16.msra.mxu0 0
    %114 = vmatprep.subr.bf16.mxu0 0
    %115 = vmatpush1.bf16.msra.mxu0 0
    %116 = vmatprep.subr.bf16.mxu0 0
    %117 = vmatpush1.bf16.msra.mxu0 0
    %118 = vmatprep.subr.bf16.mxu0 0
    %119 = vmatpush1.bf16.msra.mxu0 0
    %120 = vmatprep.subr.bf16.mxu0 0
    %121 = vmatpush1.bf16.msra.mxu0 0
    %122 = vmatprep.subr.bf16.mxu0 0
    %123 = vmatpush1.bf16.msra.mxu0 0
    %124 = vmatprep.subr.bf16.mxu0 0
    %125 = vmatpush1.bf16.msra.mxu0 0
    %126 = vmatprep.subr.bf16.mxu0 0
    %127 = vmatpush1.bf16.msra.mxu0 0
    %128 = vmatprep.subr.bf16.mxu0 0
    %129 = vmatpush1.bf16.msra.mxu0 0
    %130 = vmatprep.subr.bf16.mxu0 0
    %131 = vmatpush1.bf16.msra.mxu0 0
    %132 = vmatprep.subr.bf16.mxu0 0
    %133 = vmatpush1.bf16.msra.mxu0 0
    %134 = vmatprep.subr.bf16.mxu0 0
    %135 = vmatpush1.bf16.msra.mxu0 0
    %136 = vmatprep.mubr.bf16.mxu0 0
    %137 = vmatmul.mubr.bf16.gmra.mrb[0].mxu0 %v102
    %v138 = vpop.f32.mrb[0].mxu0
    %v139 = vadd.f32 0.0, %v138
    %v140 = vpop.f32.mrb[0].mxu0
    %v141 = vpop.f32.mrb[0].mxu0
    %v142 = vadd.f32 0.0, %v141
    %v143 = vpop.f32.mrb[0].mxu0
    %144 = vdwg.mxu0
    %v147 = vunpack.c.l.b16 %v81
    %v148 = vunpack.c.l.b16 %v82
    %v149 = vpack.c.b16 %v148, %v147
    %v152 = vunpack.c.l.b16 %v85
    %v153 = vunpack.c.l.b16 %v86
    %v154 = vpack.c.b16 %v153, %v152
    %v157 = vsel %vm100, %v149, 0
    %159 = vmatprep.subr.bf16.mxu0 0
    %160 = vmatpush1.bf16.msra.mxu0 %v154
    %161 = vmatprep.subr.bf16.mxu0 0
    %162 = vmatpush1.bf16.msra.mxu0 0
    %163 = vmatprep.subr.bf16.mxu0 0
    %164 = vmatpush1.bf16.msra.mxu0 0
    %165 = vmatprep.subr.bf16.mxu0 0
    %166 = vmatpush1.bf16.msra.mxu0 0
    %167 = vmatprep.subr.bf16.mxu0 0
    %168 = vmatpush1.bf16.msra.mxu0 0
    %169 = vmatprep.subr.bf16.mxu0 0
    %170 = vmatpush1.bf16.msra.mxu0 0
    %171 = vmatprep.subr.bf16.mxu0 0
    %172 = vmatpush1.bf16.msra.mxu0 0
    %173 = vmatprep.subr.bf16.mxu0 0
    %174 = vmatpush1.bf16.msra.mxu0 0
    %175 = vmatprep.subr.bf16.mxu0 0
    %176 = vmatpush1.bf16.msra.mxu0 0
    %177 = vmatprep.subr.bf16.mxu0 0
    %178 = vmatpush1.bf16.msra.mxu0 0
    %179 = vmatprep.subr.bf16.mxu0 0
    %180 = vmatpush1.bf16.msra.mxu0 0
    %181 = vmatprep.subr.bf16.mxu0 0
    %182 = vmatpush1.bf16.msra.mxu0 0
    %183 = vmatprep.subr.bf16.mxu0 0
    %184 = vmatpush1.bf16.msra.mxu0 0
    %185 = vmatprep.subr.bf16.mxu0 0
    %186 = vmatpush1.bf16.msra.mxu0 0
    %187 = vmatprep.subr.bf16.mxu0 0
    %188 = vmatpush1.bf16.msra.mxu0 0
    %189 = vmatprep.subr.bf16.mxu0 0
    %190 = vmatpush1.bf16.msra.mxu0 0
    %191 = vmatprep.mubr.bf16.mxu0 0
    %192 = vmatmul.mubr.bf16.gmra.mrb[0].mxu0 %v157
    %v193 = vpop.f32.mrb[0].mxu0
    %v194 = vadd.f32 %v139, %v193
    %v195 = vpop.f32.mrb[0].mxu0
    %v196 = vpop.f32.mrb[0].mxu0
    %v197 = vadd.f32 %v142, %v196
    %v198 = vpop.f32.mrb[0].mxu0
    %199 = vdwg.mxu0
    %v200 = vld [vmem:[%s4] sm:$0x1]
    %v202 = vlaneseq
    %v203 = vshrl.u32 %v202, 7
    %v204 = vsub.s32 0, %v203
    %v205 = vrot.slane %v200, %v204
    %v207 = vadd.f32 %v194, %v205
    %v208 = vadd.f32 %v197, %v205
    %v209 = vmax.f32 %v207, 0.0
    %v210 = vmax.f32 %v208, 0.0
    %v211 = vpack.c.bf16 %v210, %v209
    %v212 = vld [vmem:[%s5] sm:$0xf]
    %v213 = vld [vmem:[%s5 + $0x4] sm:$0xf]
    %v214 = vld [vmem:[%s5 + $0x8] sm:$0xf]
    %v215 = vld [vmem:[%s5 + $0xc] sm:$0xf]
    %v216 = vld [vmem:[%s6] sm:$0x1]
    %v218 = vlaneseq
    %v219 = vshrl.u32 %v218, 7
    %v220 = vsub.s32 0, %v219
    %v221 = vrot.slane %v216, %v220
    %v227 = vunpack.c.l.b16 %v212
    %v228 = vunpack.c.l.b16 %v213
    %v229 = vunpack.c.l.b16 %v214
    %v230 = vunpack.c.l.b16 %v215
    %v231 = vpack.c.b16 %v228, %v227
    %v232 = vpack.c.b16 %v230, %v229
    %vm235 = vcmask 261120
    %v237 = vsel %vm235, %v211, 0
    %239 = vmatprep.subr.bf16.mxu0 0
    %240 = vmatpush1.bf16.msra.mxu0 %v231
    %241 = vmatprep.subr.bf16.mxu0 0
    %242 = vmatpush1.bf16.msra.mxu0 %v232
    %243 = vmatprep.subr.bf16.mxu0 0
    %244 = vmatpush1.bf16.msra.mxu0 0
    %245 = vmatprep.subr.bf16.mxu0 0
    %246 = vmatpush1.bf16.msra.mxu0 0
    %247 = vmatprep.subr.bf16.mxu0 0
    %248 = vmatpush1.bf16.msra.mxu0 0
    %249 = vmatprep.subr.bf16.mxu0 0
    %250 = vmatpush1.bf16.msra.mxu0 0
    %251 = vmatprep.subr.bf16.mxu0 0
    %252 = vmatpush1.bf16.msra.mxu0 0
    %253 = vmatprep.subr.bf16.mxu0 0
    %254 = vmatpush1.bf16.msra.mxu0 0
    %255 = vmatprep.subr.bf16.mxu0 0
    %256 = vmatpush1.bf16.msra.mxu0 0
    %257 = vmatprep.subr.bf16.mxu0 0
    %258 = vmatpush1.bf16.msra.mxu0 0
    %259 = vmatprep.subr.bf16.mxu0 0
    %260 = vmatpush1.bf16.msra.mxu0 0
    %261 = vmatprep.subr.bf16.mxu0 0
    %262 = vmatpush1.bf16.msra.mxu0 0
    %263 = vmatprep.subr.bf16.mxu0 0
    %264 = vmatpush1.bf16.msra.mxu0 0
    %265 = vmatprep.subr.bf16.mxu0 0
    %266 = vmatpush1.bf16.msra.mxu0 0
    %267 = vmatprep.subr.bf16.mxu0 0
    %268 = vmatpush1.bf16.msra.mxu0 0
    %269 = vmatprep.subr.bf16.mxu0 0
    %270 = vmatpush1.bf16.msra.mxu0 0
    %271 = vmatprep.mubr.bf16.mxu0 0
    %272 = vmatmul.mubr.bf16.gmra.mrb[0].mxu0 %v237
    %v273 = vpop.f32.mrb[0].mxu0
    %v274 = vadd.f32 %v221, %v273
    %v275 = vpop.f32.mrb[0].mxu0
    %v276 = vpop.f32.mrb[0].mxu0
    %v277 = vadd.f32 %v221, %v276
    %v278 = vpop.f32.mrb[0].mxu0
    %279 = vdwg.mxu0
    %v280 = vmax.f32 %v274, 0.0
    %v281 = vmax.f32 %v277, 0.0
    %v282 = vpack.c.bf16 %v281, %v280
    %v283 = vld [vmem:[%s7] sm:$0xf]
    %v284 = vld [vmem:[%s7 + $0x4] sm:$0xf]
    %v285 = vld [vmem:[%s7 + $0x8] sm:$0xf]
    %v286 = vld [vmem:[%s7 + $0xc] sm:$0xf]
    %v287 = vld [vmem:[%s8] sm:$0x1]
    %v289 = vlaneseq
    %v290 = vshrl.u32 %v289, 7
    %v291 = vsub.s32 0, %v290
    %v292 = vrot.slane %v287, %v291
    %v298 = vunpack.c.l.b16 %v283
    %v299 = vunpack.c.l.b16 %v284
    %v300 = vunpack.c.l.b16 %v285
    %v301 = vunpack.c.l.b16 %v286
    %v302 = vpack.c.b16 %v299, %v298
    %v303 = vpack.c.b16 %v301, %v300
    %v307 = vsel %vm235, %v282, 0
    %309 = vmatprep.subr.bf16.mxu0 0
    %310 = vmatpush1.bf16.msra.mxu0 %v302
    %311 = vmatprep.subr.bf16.mxu0 0
    %312 = vmatpush1.bf16.msra.mxu0 %v303
    %313 = vmatprep.subr.bf16.mxu0 0
    %314 = vmatpush1.bf16.msra.mxu0 0
    %315 = vmatprep.subr.bf16.mxu0 0
    %316 = vmatpush1.bf16.msra.mxu0 0
    %317 = vmatprep.subr.bf16.mxu0 0
    %318 = vmatpush1.bf16.msra.mxu0 0
    %319 = vmatprep.subr.bf16.mxu0 0
    %320 = vmatpush1.bf16.msra.mxu0 0
    %321 = vmatprep.subr.bf16.mxu0 0
    %322 = vmatpush1.bf16.msra.mxu0 0
    %323 = vmatprep.subr.bf16.mxu0 0
    %324 = vmatpush1.bf16.msra.mxu0 0
    %325 = vmatprep.subr.bf16.mxu0 0
    %326 = vmatpush1.bf16.msra.mxu0 0
    %327 = vmatprep.subr.bf16.mxu0 0
    %328 = vmatpush1.bf16.msra.mxu0 0
    %329 = vmatprep.subr.bf16.mxu0 0
    %330 = vmatpush1.bf16.msra.mxu0 0
    %331 = vmatprep.subr.bf16.mxu0 0
    %332 = vmatpush1.bf16.msra.mxu0 0
    %333 = vmatprep.subr.bf16.mxu0 0
    %334 = vmatpush1.bf16.msra.mxu0 0
    %335 = vmatprep.subr.bf16.mxu0 0
    %336 = vmatpush1.bf16.msra.mxu0 0
    %337 = vmatprep.subr.bf16.mxu0 0
    %338 = vmatpush1.bf16.msra.mxu0 0
    %339 = vmatprep.subr.bf16.mxu0 0
    %340 = vmatpush1.bf16.msra.mxu0 0
    %341 = vmatprep.mubr.bf16.mxu0 0
    %342 = vmatmul.mubr.bf16.gmra.mrb[0].mxu0 %v307
    %v343 = vpop.f32.mrb[0].mxu0
    %v344 = vadd.f32 %v292, %v343
    %v345 = vpop.f32.mrb[0].mxu0
    %v346 = vpop.f32.mrb[0].mxu0
    %v347 = vadd.f32 %v292, %v346
    %v348 = vpop.f32.mrb[0].mxu0
    %349 = vdwg.mxu0
    %v350 = vmax.f32 %v344, 0.0
    %v351 = vmax.f32 %v347, 0.0
    %v352 = vld [vmem:[%s9] sm:$0x1]
    %v354 = vlaneseq
    %v355 = vshrl.u32 %v354, 7
    %v356 = vsub.s32 0, %v355
    %v357 = vrot.slane %v352, %v356
    %v359 = vmul.f32 %v350, %v357
    %v360 = vmul.f32 %v351, %v357
    %v361 = vsel %vm100, %v359, 0.0
    %362 = vadd.xlane.f32.xlu0 %v361
    %v363 = vpop.xlane.xlu0 %362
    %v364 = vsel %vm100, %v360, 0.0
    %365 = vadd.xlane.f32.xlu0 %v364
    %v366 = vpop.xlane.xlu0 %365
    %s367 = sld [smem:[#allocation2]]
    %v368 = vstv %s367
    %v369 = vadd.f32 %v363, %v368
    %v370 = vadd.f32 %v366, %v368
    %vm371 = vcmask 7168
    %372 = vst.msk [vmem:[%s11] sm:$0xff] %vm371, %v369
    %373 = vst.msk [vmem:[%s11 + $0x8] sm:$0xff] %vm371, %v370
    // Predicated region
    $region58: #{tpu_custom_call.1} parent=1 // pred_check
      _
    $region59: #{tpu_custom_call.1} parent=1 // pred_check_branch
      %375 = sbr.rel (0) target = $region61
    $region60: #{tpu_custom_call.1} parent=1 // pred_region
      _
    $region61: #{tpu_custom_call.1} parent=1 // pred_fallthru
      _
    // Predicated region
    $region62: #{tpu_custom_call.1} parent=1 // pred_check
      _
    $region63: #{tpu_custom_call.1} parent=1 // pred_check_branch
      %377 = sbr.rel (0) target = $region65
    $region64: #{tpu_custom_call.1} parent=1 // pred_region
      _
    $region65: #{tpu_custom_call.1} parent=1 // pred_fallthru
      _
    %378 = vsyncpa [#allocation4], 1
    %379 = vsyncpa [#allocation6], 1

</llo_original>
